<compile_context>
chip_gen: v5e
topology: v5e:2x2
jax: 0.10.0
libtpu: 0.0.40
codegen_flags: <defaults>
</compile_context>

<pallas_src>
import jax
import jax.numpy as jnp
from jax.experimental import pallas as pl
from jax.experimental.pallas import tpu as pltpu


def graph_conv_kernel(s_ref, b_ref, y_ref, o_ref):
    # s_ref : (H, K*W)        supports, rows = h, lanes = (k, w)        [resident]
    # b_ref : (1, G*T*O)      bias tiled along (g, t), float32          [resident]
    # y_ref : (1, K*W, G*T*O) weight-premixed inputs for this group     [streamed]
    # o_ref : (1, H, G*T*O)   output tile, lanes ordered (g, t, o) — lane dense
    #
    # Single fused MXU dot, contraction depth K*W (= K*N), f32 accumulation.
    acc = jnp.dot(s_ref[...], y_ref[0], preferred_element_type=jnp.float32)
    o_ref[0] = (acc + b_ref[...]).astype(o_ref.dtype)


def _pick_group_size(batch, seq_len, out_feat, target_lanes=1024, min_groups=2):
    """Pick G (a divisor of batch): G batches are folded into the lane axis.

    Preference order:
      1. G*T*O is a multiple of 128  -> unmasked lane-dense stores (all gens)
      2. batch // G >= min_groups    -> >=2 grid steps (v7x dual TensorCore)
      3. larger folded lane width    -> amortize ~0.35 us per-grid-step overhead
    bounded by `target_lanes` so tiles stay within a sane VMEM budget.
    """
    per_batch = seq_len * out_feat
    best_g, best_key = 1, None
    for g in range(1, batch + 1):
        if batch % g:
            continue
        lanes = g * per_batch
        if lanes > target_lanes and g > 1:
            continue
        key = (lanes % 128 == 0, (batch // g) >= min_groups, lanes)
        if best_key is None or key > best_key:
            best_g, best_key = g, key
    return best_g


def _vmem_limit_bytes(kw, gto, h, stream_itemsize):
    """Explicit VMEM budget: residents + double-buffered streamed tiles + headroom."""
    resident = h * kw * stream_itemsize + gto * 4          # supports + bias
    streamed = 2 * (kw * gto * stream_itemsize) + 2 * (h * gto * 4)  # 2x buffered y + out
    need = resident + streamed
    # Raise above v5e's 16 MiB scoped default; cap below v7x's 64 MiB physical VMEM.
    return int(min(48 * 2**20, max(32 * 2**20, 4 * need + (2 << 20))))


def graph_conv(inputs, supports, weight, bias, *, use_bf16=True, target_lanes=1024):
    """inputs: (B, F, W, T) ('bfwt'); supports: (K, H, W); weight: (K, F, O); bias: (O,).

    Returns (B, O, H, T), matching the PyTorch GraphConv forward.
    """
    B, F, W, T = inputs.shape
    K, H, W2 = supports.shape
    O = weight.shape[2]
    assert W == W2 and H == W and weight.shape[:2] == (K, F)

    G = _pick_group_size(B, T, O, target_lanes=target_lanes)
    n_groups = B // G
    KW, GTO = K * W, G * T * O

    stream_dtype = jnp.bfloat16 if use_bf16 else jnp.float32

    # ---- wrapper-side layout plumbing + feature-weight pre-application ----
    # Y[b,(k,w),(t,o)] = sum_f inputs[b,f,w,t] * weight[k,f,o]   (F-deep, cheap)
    y = jnp.einsum('bfwt,kfo->bkwto', inputs, weight,
                   precision=jax.lax.Precision.HIGHEST)
    # fold batch group into lanes: (n_groups, K*W, G*T*O), rows (k,w), lanes (g,t,o)
    y = y.reshape(n_groups, G, K, W, T, O)
    y = jnp.transpose(y, (0, 2, 3, 1, 4, 5)).reshape(n_groups, KW, GTO)
    y = y.astype(stream_dtype)

    # supports as (H, K*W): one dot with contraction depth K*W
    s2 = jnp.transpose(supports, (1, 0, 2)).reshape(H, KW).astype(stream_dtype)

    # bias tiled along (g, t) to match the (g, t, o) lane flattening — stays f32
    bias_lane = jnp.tile(bias, G * T).reshape(1, GTO).astype(jnp.float32)

    vmem_limit = _vmem_limit_bytes(KW, GTO, H, jnp.dtype(stream_dtype).itemsize)

    out_flat = pl.pallas_call(
        graph_conv_kernel,
        out_shape=jax.ShapeDtypeStruct((n_groups, H, GTO), jnp.float32),
        grid=(n_groups,),
        in_specs=[
            pl.BlockSpec((H, KW), lambda i: (0, 0)),          # resident supports
            pl.BlockSpec((1, GTO), lambda i: (0, 0)),         # resident bias
            pl.BlockSpec((1, KW, GTO), lambda i: (i, 0, 0)),  # streamed, double-buffered
        ],
        out_specs=pl.BlockSpec((1, H, GTO), lambda i: (i, 0, 0)),
        compiler_params=pltpu.CompilerParams(
            dimension_semantics=("parallel",),
            vmem_limit_bytes=vmem_limit),
    )(s2, bias_lane, y)

    # (n_groups, H, G*T*O) -> (B, O, H, T)
    out = out_flat.reshape(n_groups, H, G, T, O)
    out = jnp.transpose(out, (0, 2, 4, 1, 3)).reshape(B, O, H, T)
    return out


if __name__ == "__main__":
    key = jax.random.PRNGKey(0)
    B, F, N, T = 2, 4, 16, 8       # batch, input_size, num_nodes, seq_len
    K, O = 2, 8                    # num supports, output_size

    k1, k2, k3 = jax.random.split(key, 3)
    inputs = jax.random.normal(k1, (B, F, N, T), dtype=jnp.float32)
    supports = jax.random.normal(k2, (K, N, N), dtype=jnp.float32)

    # synthetic params matching __init__:
    # xavier_normal_(weight, gain=1.414): std = gain * sqrt(2 / (fan_in + fan_out))
    fan_in, fan_out = F * O, K * O
    std = 1.414 * (2.0 / (fan_in + fan_out)) ** 0.5
    weight = std * jax.random.normal(k3, (K, F, O), dtype=jnp.float32)
    # nonzero bias so the bias path is actually exercised (review concern)
    bias = 0.1 * jnp.arange(O, dtype=jnp.float32)

    # pure-JAX reference mirroring the PyTorch forward
    aggr = jnp.einsum('khw,bfwt->bkfht', supports, inputs)
    ref = jnp.einsum('bkfht,kfo->boht', aggr, weight) + bias[None, :, None, None]

    # strict check: f32 streaming path (exact module numerics)
    out_f32 = jax.block_until_ready(graph_conv(inputs, supports, weight, bias,
                                               use_bf16=False))
    assert out_f32.shape == (B, O, N, T)
    assert jnp.allclose(out_f32, ref, atol=1e-3, rtol=1e-3)

    # default fast path: bf16-streamed operands, f32 accumulation
    # (looser tolerance only reflects bf16 rounding of the streamed operands)
    out = jax.block_until_ready(graph_conv(inputs, supports, weight, bias,
                                           use_bf16=True))
    assert out.shape == (B, O, N, T)
    assert jnp.allclose(out, ref, atol=1e-1, rtol=1e-1)

    print("KERNEL_OK")
</pallas_src>

<mosaic_0001>
module attributes {stable_mosaic.version = 11 : i64} {
  func.func @graph_conv_kernel(%arg0: i32, %arg1: memref<16x32xf32, #tpu.memory_space<vmem>>, %arg2: memref<1x128xf32, #tpu.memory_space<vmem>>, %arg3: memref<1x32x128xf32, #tpu.memory_space<vmem>>, %arg4: memref<1x16x128xf32, #tpu.memory_space<vmem>>) attributes {dimension_semantics = [#tpu.dimension_semantics<parallel>], iteration_bounds = array<i64: 1>, scalar_prefetch = 0 : i64, scratch_operands = 0 : i64, tpu.core_type = #tpu.core_type<tc>, window_params = [{pipeline_mode = #tpu.pipeline_mode<synchronous>, transform_indices = @transform_0, window_bounds = array<i64: 16, 32>}, {pipeline_mode = #tpu.pipeline_mode<synchronous>, transform_indices = @transform_1, window_bounds = array<i64: 1, 128>}, {transform_indices = @transform_2, window_bounds = array<i64: 1, 32, 128>}, {transform_indices = @transform_3, window_bounds = array<i64: 1, 16, 128>}]} {
    %c0 = arith.constant 0 : index
    %c0_0 = arith.constant 0 : index
    %0 = vector.load %arg1[%c0, %c0_0] : memref<16x32xf32, #tpu.memory_space<vmem>>, vector<16x32xf32>
    %c0_1 = arith.constant 0 : index
    %c0_2 = arith.constant 0 : index
    %c0_3 = arith.constant 0 : index
    %1 = vector.load %arg3[%c0_1, %c0_2, %c0_3] : memref<1x32x128xf32, #tpu.memory_space<vmem>>, vector<1x32x128xf32>
    %2 = vector.shape_cast %1 : vector<1x32x128xf32> to vector<32x128xf32>
    %cst = arith.constant dense<0.000000e+00> : vector<16x128xf32>
    %3 = tpu.matmul %0, %2, %cst {dimension_numbers = #tpu.dot_dimension_numbers<[1], [0], [0], [1], [0, 0, 1, 1], [], []>} : vector<16x32xf32>, vector<32x128xf32>, vector<16x128xf32> -> vector<16x128xf32>
    %c0_4 = arith.constant 0 : index
    %c0_5 = arith.constant 0 : index
    %4 = vector.load %arg2[%c0_4, %c0_5] : memref<1x128xf32, #tpu.memory_space<vmem>>, vector<1x128xf32>
    %5 = vector.broadcast %4 : vector<1x128xf32> to vector<16x128xf32>
    %6 = arith.addf %3, %5 : vector<16x128xf32>
    %c0_6 = arith.constant 0 : index
    %c0_7 = arith.constant 0 : index
    %c0_8 = arith.constant 0 : index
    %7 = vector.load %arg4[%c0_6, %c0_7, %c0_8] : memref<1x16x128xf32, #tpu.memory_space<vmem>>, vector<1x16x128xf32>
    %8 = vector.shape_cast %7 : vector<1x16x128xf32> to vector<16x128xf32>
    %9 = vector.shape_cast %6 : vector<16x128xf32> to vector<1x16x128xf32>
    tpu.vector_store %arg4[%c0_6, %c0_7, %c0_8], %9 {strides = array<i32>} : memref<1x16x128xf32, #tpu.memory_space<vmem>>, vector<1x16x128xf32>,
    return
  }
  func.func @transform_0(%arg0: i32) -> (i32, i32) {
    %c0_i32 = arith.constant 0 : i32
    %c0_i32_0 = arith.constant 0 : i32
    %c0_i32_1 = arith.constant 0 : i32
    return %c0_i32, %c0_i32_0 : i32, i32
  }
  func.func @transform_1(%arg0: i32) -> (i32, i32) {
    %c0_i32 = arith.constant 0 : i32
    %c0_i32_0 = arith.constant 0 : i32
    %c0_i32_1 = arith.constant 0 : i32
    return %c0_i32, %c0_i32_0 : i32, i32
  }
  func.func @transform_2(%arg0: i32) -> (i32, i32, i32) {
    %c0_i32 = arith.constant 0 : i32
    %c0_i32_0 = arith.constant 0 : i32
    %c0_i32_1 = arith.constant 0 : i32
    return %arg0, %c0_i32, %c0_i32_0 : i32, i32, i32
  }
  func.func @transform_3(%arg0: i32) -> (i32, i32, i32) {
    %c0_i32 = arith.constant 0 : i32
    %c0_i32_0 = arith.constant 0 : i32
    %c0_i32_1 = arith.constant 0 : i32
    return %arg0, %c0_i32, %c0_i32_0 : i32, i32, i32
  }
}

</mosaic_0001>

<llo_original>
// kernel: tpu_custom_call.1
$region0: #{tpu_custom_call.1}
  #allocation0 [shape = 'u32[]', space=smem, size = 0x4, offset = 0x4, fixed_abs, tag = 'smem constant byte address 0x4 - core index']
  #allocation1 [shape = 'u32[72,128]{1,0:T(1,128)}', space=vmem, size = 0x9000, scoped, tag = 'internal scratch']
  %s0 = inlined_call_operand.hbm [shape: f32[16,32], index: 0, kind: input, shape index: {}]
  %s1 = inlined_call_operand.hbm [shape: f32[1,128], index: 1, kind: input, shape index: {}]
  %s2 = inlined_call_operand.hbm [shape: f32[1,32,128], index: 2, kind: input, shape index: {}]
  %s3 = inlined_call_operand.hbm [shape: f32[1,16,128], index: 3, kind: output, shape index: {}]
  %s4 = sld [smem:[#allocation0]]
  $region34: #{tpu_custom_call.1} parent=0
    _
  %s6 = ssub.s32 1, %s4
  %s7 = scalar_select 0, %s6, %s4
  $region1: #{tpu_custom_call.1} parent=0
    #allocation2 [shape = 'u8[8192]{0}', space=vmem, size = 0x2000, scoped, tag = 'input window, operand 0, single buffered']
    #allocation3 [shape = 's32[1]{0}', space=sflag, size = 0x4, scoped, tag = 'scoped memory for tpu_custom_call.1']
    #allocation4 [shape = 's32[1]{0}', space=sflag, size = 0x4, scoped, tag = 'scoped memory for tpu_custom_call.1']
    #allocation5 [shape = 'u8[512]{0}', space=vmem, size = 0x400, scoped, tag = 'input window, operand 1, single buffered']
    #allocation6 [shape = 's32[1]{0}', space=sflag, size = 0x4, scoped, tag = 'scoped memory for tpu_custom_call.1']
    #allocation7 [shape = 'u8[16384]{0}', space=vmem, size = 0x4000, scoped, tag = 'input window, operand 2, single buffered']
    #allocation8 [shape = 'u8[8192]{0}', space=vmem, size = 0x2000, scoped, tag = 'output window, operand 0, single buffered']
    %8 = vsyncpa [#allocation3], 0
    %9 = vsyncpa [#allocation6], 0
    %10 = vsyncpa [#allocation4], 0
    // Predicated region
    $region2: #{tpu_custom_call.1} parent=1 // pred_check
      _
    $region3: #{tpu_custom_call.1} parent=1 // pred_check_branch
      %12 = sbr.rel (0) target = $region5
    $region4: #{tpu_custom_call.1} parent=1 // pred_region
      %14 = vsyncadd [#allocation3], 0
      %s15 = sshll.u32 %s0, 4
      %s16 = int_to_ptr.hbm [resolvable:$true] %s15
      %s17 = sshll.u32 [#allocation2], 4
      %s18 = int_to_ptr.vmem [resolvable:$true] %s17
      %23 = dma.hbm_to_vmem [thread:$0]  %s16, 256, %s18, [#allocation3], 128, 128, 8
    $region5: #{tpu_custom_call.1} parent=1 // pred_fallthru
      _
    // Predicated region
    $region6: #{tpu_custom_call.1} parent=1 // pred_check
      _
    $region7: #{tpu_custom_call.1} parent=1 // pred_check_branch
      %25 = sbr.rel (0) target = $region9
    $region8: #{tpu_custom_call.1} parent=1 // pred_region
      %27 = vsyncadd [#allocation6], 0
      %s29 = sshll.u32 %s1, 4
      %s30 = int_to_ptr.hbm [resolvable:$true] %s29
      %s31 = sshll.u32 [#allocation5], 4
      %s32 = int_to_ptr.vmem [resolvable:$true] %s31
      %34 = dma.hbm_to_vmem [thread:$0]  %s30, 16, %s32, [#allocation6]
    $region9: #{tpu_custom_call.1} parent=1 // pred_fallthru
      _
    // Predicated region
    $region10: #{tpu_custom_call.1} parent=1 // pred_check
      _
    $region11: #{tpu_custom_call.1} parent=1 // pred_check_branch
      %36 = sbr.rel (0) target = $region13
    $region12: #{tpu_custom_call.1} parent=1 // pred_region
      %38 = vsyncadd [#allocation6], 0
      %s39 = sshll.u32 %s2, 4
      %s40 = int_to_ptr.hbm [resolvable:$true] %s39
      %s41 = sshll.u32 [#allocation7], 4
      %s42 = int_to_ptr.vmem [resolvable:$true] %s41
      %47 = dma.hbm_to_vmem [thread:$0]  %s40, 512, %s42, [#allocation6], 128, 128, 8
    $region13: #{tpu_custom_call.1} parent=1 // pred_fallthru
      _
    // Predicated region
    $region14: #{tpu_custom_call.1} parent=1 // pred_check
      _
    $region15: #{tpu_custom_call.1} parent=1 // pred_check_branch
      %49 = sbr.rel (0) target = $region17
    $region16: #{tpu_custom_call.1} parent=1 // pred_region
      %51 = dma.done [#allocation3], 256
    $region17: #{tpu_custom_call.1} parent=1 // pred_fallthru
      _
    // Predicated region
    $region18: #{tpu_custom_call.1} parent=1 // pred_check
      _
    $region19: #{tpu_custom_call.1} parent=1 // pred_check_branch
      %53 = sbr.rel (0) target = $region21
    $region20: #{tpu_custom_call.1} parent=1 // pred_region
      %55 = dma.done [#allocation6], 16
    $region21: #{tpu_custom_call.1} parent=1 // pred_fallthru
      _
    // Predicated region
    $region22: #{tpu_custom_call.1} parent=1 // pred_check
      _
    $region23: #{tpu_custom_call.1} parent=1 // pred_check_branch
      %57 = sbr.rel (0) target = $region25
    $region24: #{tpu_custom_call.1} parent=1 // pred_region
      %59 = dma.done [#allocation6], 512
    $region25: #{tpu_custom_call.1} parent=1 // pred_fallthru
      _
    %v60 = vld [vmem:[#allocation2] sm:$0xff]
    %v61 = vld [vmem:[#allocation2 + $0x8] sm:$0xff]
    %v62 = vld [vmem:[#allocation7] sm:$0xff]
    %v63 = vld [vmem:[#allocation7 + $0x8] sm:$0xff]
    %v64 = vld [vmem:[#allocation7 + $0x10] sm:$0xff]
    %v65 = vld [vmem:[#allocation7 + $0x18] sm:$0xff]
    %v66 = vld [vmem:[#allocation5] sm:$0x1]
    %v68 = vperm.slane %v66, 0
    %vm70 = vcmask 261120
    %v72 = vsel %vm70, %v60, 0
    %v75 = vsel %vm70, %v61, 0
    %77 = vmatpush.msra.mxu0 0.0
    %78 = vmatpush.msra.mxu0 0.0
    %79 = vmatpush.msra.mxu0 0.0
    %80 = vmatpush.msra.mxu0 0.0
    %81 = vmatpush.msra.mxu0 0.0
    %82 = vmatpush.msra.mxu0 0.0
    %83 = vmatpush.msra.mxu0 0.0
    %84 = vmatpush.msra.mxu0 0.0
    %85 = vmatpush.msra.mxu0 0.0
    %86 = vmatpush.msra.mxu0 0.0
    %87 = vmatpush.msra.mxu0 0.0
    %88 = vmatpush.msra.mxu0 0.0
    %89 = vmatpush.msra.mxu0 %v65
    %90 = vmatpush.msra.mxu0 %v64
    %91 = vmatpush.msra.mxu0 %v63
    %92 = vmatpush.msra.mxu0 %v62
    %93 = vmatmul.f32.gmra.mxu0 %v72
    %v94 = vpop.f32.mrf.mxu0
    %v95 = vadd.f32 %v68, %v94
    %96 = vmatmul.f32.gmra.mxu0 %v75
    %v97 = vpop.f32.mrf.mxu0
    %v98 = vadd.f32 %v68, %v97
    %99 = vdwg.mxu0
    %100 = vst [vmem:[#allocation8] sm:$0xff] %v95
    %101 = vst [vmem:[#allocation8 + $0x8] sm:$0xff] %v98
    // Predicated region
    $region26: #{tpu_custom_call.1} parent=1 // pred_check
      _
    $region27: #{tpu_custom_call.1} parent=1 // pred_check_branch
      %103 = sbr.rel (0) target = $region29
    $region28: #{tpu_custom_call.1} parent=1 // pred_region
      %105 = vsyncadd [#allocation4], 0
      %s106 = sshll.u32 [#allocation8], 4
      %s107 = int_to_ptr.vmem [resolvable:$true] %s106
      %s108 = sshll.u32 %s3, 4
      %s109 = int_to_ptr.hbm [resolvable:$true] %s108
      %114 = dma.vmem_to_hbm [thread:$0]  %s107, 256, %s109, [#allocation4], 128, 128, 8
    $region29: #{tpu_custom_call.1} parent=1 // pred_fallthru
      _
    // Predicated region
    $region30: #{tpu_custom_call.1} parent=1 // pred_check
      _
    $region31: #{tpu_custom_call.1} parent=1 // pred_check_branch
      %116 = sbr.rel (0) target = $region33
    $region32: #{tpu_custom_call.1} parent=1 // pred_region
      %118 = dma.done [#allocation4], 256
    $region33: #{tpu_custom_call.1} parent=1 // pred_fallthru
      _
    %119 = vsyncpa [#allocation3], 1
    %120 = vsyncpa [#allocation6], 1
    %121 = vsyncpa [#allocation4], 1

</llo_original>
